<compile_context>
chip_gen: v5e
topology: v5e:2x2
jax: 0.10.0
libtpu: 0.0.40
codegen_flags: <defaults>
</compile_context>

<pallas_src>
import jax
import jax.numpy as jnp
from jax.experimental import pallas as pl
from jax.experimental.pallas import tpu as pltpu

IN_FEATURES = 342           # K (x features, phase excluded)
OUT_FEATURES = 311          # true N
CAT_FEATURES = 1 + IN_FEATURES
N_PAD = 384                 # 311 padded up to a multiple of 128 (lane-dense)
MAX_TB = 1024               # batch tile (multiple of 8 for f32 sublanes)


def _linear_kernel(p_ref, x_ref, w_ref, wb_ref, o_ref):
    # p_ref : (tb, 1)       phase column
    # x_ref : (tb, K)       inputs (f32)
    # w_ref : (K, N_PAD)    pre-transposed weight (rows 1..342 of W), bf16 or f32
    # wb_ref: (2, N_PAD)    row 0 = phase weight row of W, row 1 = bias (f32)
    # o_ref : (tb, N_PAD)
    x = x_ref[...].astype(w_ref.dtype)          # cheap VPU cast, hidden under MXU
    # Explicit precision decision: exact f32 parity when weights are f32,
    # single-pass bf16 MXU otherwise (accumulation stays f32 either way).
    precision = jax.lax.Precision.HIGHEST if w_ref.dtype == jnp.float32 else None
    acc = jnp.dot(x, w_ref[...],
                  preferred_element_type=jnp.float32, precision=precision)
    o_ref[...] = (acc + p_ref[...] * wb_ref[0:1, :] + wb_ref[1:2, :]).astype(o_ref.dtype)


def prepare_params(weight, bias, param_dtype=jnp.bfloat16):
    """One-time parameter prep (do this at init / load, not per forward).

    weight: (311, 343) float32   (PyTorch nn.Linear layout: (out, in))
    bias:   (311,)     float32
    returns:
      w_x: (342, 384) param_dtype   pre-transposed x-weight, lane-padded
      wb : (2,   384) float32       [phase weight row; bias], lane-padded
    """
    pad = N_PAD - OUT_FEATURES
    w_x = jnp.pad(weight[:, 1:].T, ((0, 0), (0, pad))).astype(param_dtype)
    wb = jnp.pad(jnp.stack([weight[:, 0], bias], axis=0), ((0, 0), (0, pad)))
    return w_x, wb.astype(jnp.float32)


def _pick_tile(B):
    if B < 16:
        return B                      # single tile; grid=(1,)
    # >=2 grid steps for megacore, rows a multiple of 8, capped at MAX_TB.
    return min(MAX_TB, 8 * pl.cdiv(B, 16))


def linear_net_forward(p, x, w_x, wb, return_padded=False):
    """
    p: (B,) float32, x: (B, 342) float32, (w_x, wb) from prepare_params.
    returns (B, 311) float32  (or (B, 384) padded if return_padded=True).
    """
    B = x.shape[0]
    p2 = p[:, None]                                  # (B, 1), tiny
    tb = _pick_tile(B)
    grid = (pl.cdiv(B, tb),)

    w_bytes = w_x.size * w_x.dtype.itemsize
    flops = 2 * B * IN_FEATURES * N_PAD
    bytes_accessed = (4 * (B * IN_FEATURES + B + 2 * N_PAD + B * N_PAD)
                      + w_bytes)

    out = pl.pallas_call(
        _linear_kernel,
        out_shape=jax.ShapeDtypeStruct((B, N_PAD), jnp.float32),
        grid=grid,
        in_specs=[
            pl.BlockSpec((tb, 1), lambda i: (i, 0)),                 # p
            pl.BlockSpec((tb, IN_FEATURES), lambda i: (i, 0)),       # x
            pl.BlockSpec((IN_FEATURES, N_PAD), lambda i: (0, 0)),    # w_x (resident)
            pl.BlockSpec((2, N_PAD), lambda i: (0, 0)),              # [w_p; b] (resident)
        ],
        out_specs=pl.BlockSpec((tb, N_PAD), lambda i: (i, 0)),
        compiler_params=pltpu.CompilerParams(
            dimension_semantics=("parallel",),       # megacore-shardable on v7x
        ),
        cost_estimate=pl.CostEstimate(
            flops=flops, transcendentals=0, bytes_accessed=int(bytes_accessed)
        ),
    )(p2, x, w_x, wb)

    if return_padded:
        # Padded columns are zero-weight + zero-bias garbage-free? No: they are
        # exactly bias-pad (= 0) + 0-weight contributions, i.e. zeros.
        return out
    # TODO(synk): verify this slice fuses into the consumer in HLO; if it
    # materializes, prefer return_padded=True and slice downstream.
    return out[:, :OUT_FEATURES]


if __name__ == "__main__":
    key = jax.random.PRNGKey(0)
    k_p, k_x, k_w, k_b = jax.random.split(key, 4)

    batch = 2
    # synthetic parameters matching nn.Linear(343, 311) shapes/init
    bound = 1.0 / jnp.sqrt(jnp.float32(CAT_FEATURES))
    weight = jax.random.uniform(
        k_w, (OUT_FEATURES, CAT_FEATURES), jnp.float32, -bound, bound
    )
    bias = jax.random.uniform(k_b, (OUT_FEATURES,), jnp.float32, -bound, bound)

    # deterministic inputs
    p = jax.random.uniform(k_p, (batch,), jnp.float32)
    x = jax.random.normal(k_x, (batch, IN_FEATURES), jnp.float32)

    # one-time parameter prep (bf16 weight path), then jit the forward
    w_x, wb = prepare_params(weight, bias)          # default bf16 weights
    fwd = jax.jit(linear_net_forward)

    y = fwd(p, x, w_x, wb)
    jax.block_until_ready(y)

    # sanity check against plain-JAX reference of the PyTorch forward
    ref = jnp.concatenate([p[:, None], x], axis=1) @ weight.T + bias
    assert y.shape == (batch, OUT_FEATURES)
    # bf16-weight path: tolerance sized for bf16 rounding over K=342 terms
    assert jnp.allclose(y, ref, atol=2e-2, rtol=2e-2)

    # exact-parity path (f32 weights, precision=HIGHEST) for tight check
    w_x32, wb32 = prepare_params(weight, bias, param_dtype=jnp.float32)
    y32 = jax.jit(linear_net_forward)(p, x, w_x32, wb32)
    jax.block_until_ready(y32)
    assert jnp.allclose(y32, ref, atol=1e-4, rtol=1e-4)

    print("KERNEL_OK")
</pallas_src>

<mosaic_0001>
module attributes {stable_mosaic.version = 11 : i64} {
  func.func @_linear_kernel(%arg0: i32, %arg1: memref<2x1xf32, #tpu.memory_space<vmem>>, %arg2: memref<2x342xf32, #tpu.memory_space<vmem>>, %arg3: memref<342x384xbf16, #tpu.memory_space<vmem>>, %arg4: memref<2x384xf32, #tpu.memory_space<vmem>>, %arg5: memref<2x384xf32, #tpu.memory_space<vmem>>) attributes {dimension_semantics = [#tpu.dimension_semantics<parallel>], iteration_bounds = array<i64: 1>, scalar_prefetch = 0 : i64, scratch_operands = 0 : i64, tpu.core_type = #tpu.core_type<tc>, window_params = [{transform_indices = @transform_0, window_bounds = array<i64: 2, 1>}, {transform_indices = @transform_1, window_bounds = array<i64: 2, 342>}, {pipeline_mode = #tpu.pipeline_mode<synchronous>, transform_indices = @transform_2, window_bounds = array<i64: 342, 384>}, {pipeline_mode = #tpu.pipeline_mode<synchronous>, transform_indices = @transform_3, window_bounds = array<i64: 2, 384>}, {transform_indices = @transform_4, window_bounds = array<i64: 2, 384>}]} {
    %c0 = arith.constant 0 : index
    %c0_0 = arith.constant 0 : index
    %0 = vector.load %arg2[%c0, %c0_0] : memref<2x342xf32, #tpu.memory_space<vmem>>, vector<2x342xf32>
    %1 = arith.truncf %0 : vector<2x342xf32> to vector<2x342xbf16>
    %c0_1 = arith.constant 0 : index
    %c0_2 = arith.constant 0 : index
    %2 = vector.load %arg3[%c0_1, %c0_2] : memref<342x384xbf16, #tpu.memory_space<vmem>>, vector<342x384xbf16>
    %cst = arith.constant dense<0.000000e+00> : vector<2x384xf32>
    %3 = tpu.matmul %1, %2, %cst {dimension_numbers = #tpu.dot_dimension_numbers<[1], [0], [0], [1], [0, 0, 1, 1], [], []>} : vector<2x342xbf16>, vector<342x384xbf16>, vector<2x384xf32> -> vector<2x384xf32>
    %c0_3 = arith.constant 0 : index
    %c0_4 = arith.constant 0 : index
    %4 = vector.load %arg1[%c0_3, %c0_4] : memref<2x1xf32, #tpu.memory_space<vmem>>, vector<2x1xf32>
    %c0_5 = arith.constant 0 : index
    %c0_6 = arith.constant 0 : index
    %5 = vector.load %arg4[%c0_5, %c0_6] : memref<2x384xf32, #tpu.memory_space<vmem>>, vector<1x384xf32>
    %6 = vector.broadcast %4 : vector<2x1xf32> to vector<2x384xf32>
    %7 = vector.broadcast %5 : vector<1x384xf32> to vector<2x384xf32>
    %8 = arith.mulf %6, %7 : vector<2x384xf32>
    %9 = arith.addf %3, %8 : vector<2x384xf32>
    %c1 = arith.constant 1 : index
    %c0_7 = arith.constant 0 : index
    %10 = vector.load %arg4[%c1, %c0_7] : memref<2x384xf32, #tpu.memory_space<vmem>>, vector<1x384xf32>
    %11 = vector.broadcast %10 : vector<1x384xf32> to vector<2x384xf32>
    %12 = arith.addf %9, %11 : vector<2x384xf32>
    %c0_8 = arith.constant 0 : index
    %c0_9 = arith.constant 0 : index
    %13 = vector.load %arg5[%c0_8, %c0_9] : memref<2x384xf32, #tpu.memory_space<vmem>>, vector<2x384xf32>
    tpu.vector_store %arg5[%c0_8, %c0_9], %12 {strides = array<i32>} : memref<2x384xf32, #tpu.memory_space<vmem>>, vector<2x384xf32>,
    return
  }
  func.func @transform_0(%arg0: i32) -> (i32, i32) {
    %c0_i32 = arith.constant 0 : i32
    %c0_i32_0 = arith.constant 0 : i32
    return %arg0, %c0_i32 : i32, i32
  }
  func.func @transform_1(%arg0: i32) -> (i32, i32) {
    %c0_i32 = arith.constant 0 : i32
    %c0_i32_0 = arith.constant 0 : i32
    return %arg0, %c0_i32 : i32, i32
  }
  func.func @transform_2(%arg0: i32) -> (i32, i32) {
    %c0_i32 = arith.constant 0 : i32
    %c0_i32_0 = arith.constant 0 : i32
    %c0_i32_1 = arith.constant 0 : i32
    return %c0_i32, %c0_i32_0 : i32, i32
  }
  func.func @transform_3(%arg0: i32) -> (i32, i32) {
    %c0_i32 = arith.constant 0 : i32
    %c0_i32_0 = arith.constant 0 : i32
    %c0_i32_1 = arith.constant 0 : i32
    return %c0_i32, %c0_i32_0 : i32, i32
  }
  func.func @transform_4(%arg0: i32) -> (i32, i32) {
    %c0_i32 = arith.constant 0 : i32
    %c0_i32_0 = arith.constant 0 : i32
    return %arg0, %c0_i32 : i32, i32
  }
}

</mosaic_0001>

<llo_original>
// kernel: linear_net_forward.1
$region0: #{linear_net_forward.1}
  #allocation0 [shape = 'u32[]', space=smem, size = 0x4, offset = 0x4, fixed_abs, tag = 'smem constant byte address 0x4 - core index']
  #allocation1 [shape = 'u32[72,128]{1,0:T(1,128)}', space=vmem, size = 0x9000, scoped, tag = 'internal scratch']
  %s0 = inlined_call_operand.vmem [shape: f32[2,1], index: 0, kind: input, shape index: {}]
  %s1 = inlined_call_operand.hbm [shape: f32[2,342], index: 1, kind: input, shape index: {}]
  %s2 = inlined_call_operand.hbm [shape: bf16[342,384], index: 2, kind: input, shape index: {}]
  %s3 = inlined_call_operand.vmem [shape: f32[2,384], index: 3, kind: input, shape index: {}]
  %s4 = inlined_call_operand.hbm [shape: f32[2,384], index: 4, kind: output, shape index: {}]
  %s5 = sld [smem:[#allocation0]]
  $region34: #{linear_net_forward.1} parent=0
    _
  %s7 = ssub.s32 1, %s5
  %s8 = scalar_select 0, %s7, %s5
  $region1: #{linear_net_forward.1} parent=0
    #allocation2 [shape = 'u8[3072]{0}', space=vmem, size = 0xc00, scoped, tag = 'input window, operand 1, single buffered']
    #allocation3 [shape = 's32[1]{0}', space=sflag, size = 0x4, scoped, tag = 'scoped memory for linear_net_forward.1']
    #allocation4 [shape = 's32[1]{0}', space=sflag, size = 0x4, scoped, tag = 'scoped memory for linear_net_forward.1']
    #allocation5 [shape = 'u8[264192]{0}', space=vmem, size = 0x40800, scoped, tag = 'input window, operand 2, single buffered']
    #allocation6 [shape = 's32[1]{0}', space=sflag, size = 0x4, scoped, tag = 'scoped memory for linear_net_forward.1']
    #allocation7 [shape = 'u8[3072]{0}', space=vmem, size = 0xc00, scoped, tag = 'output window, operand 0, single buffered']
    %9 = vsyncpa [#allocation3], 0
    %10 = vsyncpa [#allocation6], 0
    %11 = vsyncpa [#allocation4], 0
    // Predicated region
    $region2: #{linear_net_forward.1} parent=1 // pred_check
      _
    $region3: #{linear_net_forward.1} parent=1 // pred_check_branch
      %13 = sbr.rel (0) target = $region5
    $region4: #{linear_net_forward.1} parent=1 // pred_region
      _
    $region5: #{linear_net_forward.1} parent=1 // pred_fallthru
      _
    // Predicated region
    $region6: #{linear_net_forward.1} parent=1 // pred_check
      _
    $region7: #{linear_net_forward.1} parent=1 // pred_check_branch
      %15 = sbr.rel (0) target = $region9
    $region8: #{linear_net_forward.1} parent=1 // pred_region
      %17 = vsyncadd [#allocation3], 0
      %s19 = sshll.u32 %s1, 4
      %s20 = int_to_ptr.hbm [resolvable:$true] %s19
      %s21 = sshll.u32 [#allocation2], 4
      %s22 = int_to_ptr.vmem [resolvable:$true] %s21
      %24 = dma.hbm_to_vmem [thread:$0]  %s20, 96, %s22, [#allocation3]
    $region9: #{linear_net_forward.1} parent=1 // pred_fallthru
      _
    // Predicated region
    $region10: #{linear_net_forward.1} parent=1 // pred_check
      _
    $region11: #{linear_net_forward.1} parent=1 // pred_check_branch
      %26 = sbr.rel (0) target = $region13
    $region12: #{linear_net_forward.1} parent=1 // pred_region
      %28 = vsyncadd [#allocation6], 0
      %s29 = sshll.u32 %s2, 4
      %s30 = int_to_ptr.hbm [resolvable:$true] %s29
      %s31 = sshll.u32 [#allocation5], 4
      %s32 = int_to_ptr.vmem [resolvable:$true] %s31
      %37 = dma.hbm_to_vmem [thread:$0]  %s30, 8256, %s32, [#allocation6], 192, 192, 12
    $region13: #{linear_net_forward.1} parent=1 // pred_fallthru
      _
    // Predicated region
    $region14: #{linear_net_forward.1} parent=1 // pred_check
      _
    $region15: #{linear_net_forward.1} parent=1 // pred_check_branch
      %39 = sbr.rel (0) target = $region17
    $region16: #{linear_net_forward.1} parent=1 // pred_region
      _
    $region17: #{linear_net_forward.1} parent=1 // pred_fallthru
      _
    // Predicated region
    $region18: #{linear_net_forward.1} parent=1 // pred_check
      _
    $region19: #{linear_net_forward.1} parent=1 // pred_check_branch
      %41 = sbr.rel (0) target = $region21
    $region20: #{linear_net_forward.1} parent=1 // pred_region
      %43 = dma.done [#allocation3], 96
    $region21: #{linear_net_forward.1} parent=1 // pred_fallthru
      _
    // Predicated region
    $region22: #{linear_net_forward.1} parent=1 // pred_check
      _
    $region23: #{linear_net_forward.1} parent=1 // pred_check_branch
      %45 = sbr.rel (0) target = $region25
    $region24: #{linear_net_forward.1} parent=1 // pred_region
      %47 = dma.done [#allocation6], 8256
    $region25: #{linear_net_forward.1} parent=1 // pred_fallthru
      _
    %v49 = vld [vmem:[#allocation2] sm:$0x3f]
    %51 = vst [vmem:[#allocation1] ss:$4 sm:$0xff] %v49
    %v52 = vld.sshfl [vmem:[#allocation1] sm:$0xff pattern:$0x73625140]
    %v53 = vld.sshfl [vmem:[#allocation1 + $0x8] sm:$0xff pattern:$0x73625140]
    %v54 = vld.sshfl [vmem:[#allocation1 + $0x10] sm:$0xff pattern:$0x73625140]
    %v58 = vpack.c.bf16 %v52, %v52
    %v59 = vpack.c.bf16 %v53, %v53
    %v60 = vpack.c.bf16 %v54, %v54
    %v61 = vld [vmem:[#allocation5] sm:$0xff]
    %v62 = vld [vmem:[#allocation5 + $0x8] sm:$0xf]
    %v63 = vld [vmem:[#allocation5 + $0xc] sm:$0xff]
    %v64 = vld [vmem:[#allocation5 + $0x14] sm:$0xf]
    %v65 = vld [vmem:[#allocation5 + $0x18] sm:$0xff]
    %v66 = vld [vmem:[#allocation5 + $0x20] sm:$0xf]
    %v67 = vld [vmem:[#allocation5 + $0x24] sm:$0xff]
    %v68 = vld [vmem:[#allocation5 + $0x2c] sm:$0xf]
    %v69 = vld [vmem:[#allocation5 + $0x30] sm:$0xff]
    %v70 = vld [vmem:[#allocation5 + $0x38] sm:$0xf]
    %v71 = vld [vmem:[#allocation5 + $0x3c] sm:$0xff]
    %v72 = vld [vmem:[#allocation5 + $0x44] sm:$0xf]
    %v73 = vld [vmem:[#allocation5 + $0x48] sm:$0xff]
    %v74 = vld [vmem:[#allocation5 + $0x50] sm:$0xf]
    %v75 = vld [vmem:[#allocation5 + $0x54] sm:$0xff]
    %v76 = vld [vmem:[#allocation5 + $0x5c] sm:$0xf]
    %v77 = vld [vmem:[#allocation5 + $0x60] sm:$0xff]
    %v78 = vld [vmem:[#allocation5 + $0x68] sm:$0xf]
    %v79 = vld [vmem:[#allocation5 + $0x6c] sm:$0xff]
    %v80 = vld [vmem:[#allocation5 + $0x74] sm:$0xf]
    %v81 = vld [vmem:[#allocation5 + $0x78] sm:$0xff]
    %v82 = vld [vmem:[#allocation5 + $0x80] sm:$0xf]
    %v83 = vld [vmem:[#allocation5 + $0x84] sm:$0xff]
    %v84 = vld [vmem:[#allocation5 + $0x8c] sm:$0xf]
    %v85 = vld [vmem:[#allocation5 + $0x90] sm:$0xff]
    %v86 = vld [vmem:[#allocation5 + $0x98] sm:$0xf]
    %v87 = vld [vmem:[#allocation5 + $0x9c] sm:$0xff]
    %v88 = vld [vmem:[#allocation5 + $0xa4] sm:$0xf]
    %v89 = vld [vmem:[#allocation5 + $0xa8] sm:$0xff]
    %v90 = vld [vmem:[#allocation5 + $0xb0] sm:$0xf]
    %v91 = vld [vmem:[#allocation5 + $0xb4] sm:$0xff]
    %v92 = vld [vmem:[#allocation5 + $0xbc] sm:$0xf]
    %v93 = vld [vmem:[#allocation5 + $0xc0] sm:$0xff]
    %v94 = vld [vmem:[#allocation5 + $0xc8] sm:$0xf]
    %v95 = vld [vmem:[#allocation5 + $0xcc] sm:$0xff]
    %v96 = vld [vmem:[#allocation5 + $0xd4] sm:$0xf]
    %v97 = vld [vmem:[#allocation5 + $0xd8] sm:$0xff]
    %v98 = vld [vmem:[#allocation5 + $0xe0] sm:$0xf]
    %v99 = vld [vmem:[#allocation5 + $0xe4] sm:$0xff]
    %v100 = vld [vmem:[#allocation5 + $0xec] sm:$0xf]
    %v101 = vld [vmem:[#allocation5 + $0xf0] sm:$0xff]
    %v102 = vld [vmem:[#allocation5 + $0xf8] sm:$0xf]
    %v103 = vld [vmem:[#allocation5 + $0xfc] sm:$0xff]
    %v104 = vld [vmem:[#allocation5 + $0x104] sm:$0xf]
    %v105 = vld [vmem:[#allocation5 + $0x108] sm:$0xff]
    %v106 = vld [vmem:[#allocation5 + $0x110] sm:$0xf]
    %v107 = vld [vmem:[#allocation5 + $0x114] sm:$0xff]
    %v108 = vld [vmem:[#allocation5 + $0x11c] sm:$0xf]
    %v109 = vld [vmem:[#allocation5 + $0x120] sm:$0xff]
    %v110 = vld [vmem:[#allocation5 + $0x128] sm:$0xf]
    %v111 = vld [vmem:[#allocation5 + $0x12c] sm:$0xff]
    %v112 = vld [vmem:[#allocation5 + $0x134] sm:$0xf]
    %v113 = vld [vmem:[#allocation5 + $0x138] sm:$0xff]
    %v114 = vld [vmem:[#allocation5 + $0x140] sm:$0xf]
    %v115 = vld [vmem:[#allocation5 + $0x144] sm:$0xff]
    %v116 = vld [vmem:[#allocation5 + $0x14c] sm:$0xf]
    %v117 = vld [vmem:[#allocation5 + $0x150] sm:$0xff]
    %v118 = vld [vmem:[#allocation5 + $0x158] sm:$0xf]
    %v119 = vld [vmem:[#allocation5 + $0x15c] sm:$0xff]
    %v120 = vld [vmem:[#allocation5 + $0x164] sm:$0xf]
    %v121 = vld [vmem:[#allocation5 + $0x168] sm:$0xff]
    %v122 = vld [vmem:[#allocation5 + $0x170] sm:$0xf]
    %v123 = vld [vmem:[#allocation5 + $0x174] sm:$0xff]
    %v124 = vld [vmem:[#allocation5 + $0x17c] sm:$0xf]
    %v125 = vld [vmem:[#allocation5 + $0x180] sm:$0xff]
    %v126 = vld [vmem:[#allocation5 + $0x188] sm:$0xf]
    %v127 = vld [vmem:[#allocation5 + $0x18c] sm:$0xff]
    %v128 = vld [vmem:[#allocation5 + $0x194] sm:$0xf]
    %v129 = vld [vmem:[#allocation5 + $0x198] sm:$0xff]
    %v130 = vld [vmem:[#allocation5 + $0x1a0] sm:$0xf]
    %v131 = vld [vmem:[#allocation5 + $0x1a4] sm:$0xff]
    %v132 = vld [vmem:[#allocation5 + $0x1ac] sm:$0xf]
    %v133 = vld [vmem:[#allocation5 + $0x1b0] sm:$0xff]
    %v134 = vld [vmem:[#allocation5 + $0x1b8] sm:$0xf]
    %v135 = vld [vmem:[#allocation5 + $0x1bc] sm:$0xff]
    %v136 = vld [vmem:[#allocation5 + $0x1c4] sm:$0xf]
    %v137 = vld [vmem:[#allocation5 + $0x1c8] sm:$0xff]
    %v138 = vld [vmem:[#allocation5 + $0x1d0] sm:$0xf]
    %v139 = vld [vmem:[#allocation5 + $0x1d4] sm:$0xff]
    %v140 = vld [vmem:[#allocation5 + $0x1dc] sm:$0xf]
    %v141 = vld [vmem:[#allocation5 + $0x1e0] sm:$0xff]
    %v142 = vld [vmem:[#allocation5 + $0x1e8] sm:$0xf]
    %v143 = vld [vmem:[#allocation5 + $0x1ec] sm:$0xff]
    %v144 = vld [vmem:[#allocation5 + $0x1f4] sm:$0xf]
    %v145 = vld [vmem:[#allocation5 + $0x1f8] sm:$0x77]
    %v146 = vld [vmem:[#allocation5 + $0x200] sm:$0x7]
    %v147 = vld [vmem:[%s0] sm:$0x3]
    %v148 = vld [vmem:[%s3] ss:$2 sm:$0x7]
    %150 = vset.pattern.permute.xlu0 0
    %151 = vperm.xlu0 %150, %v147
    %v152 = vpop.permute.xlu0 %151
    %v155 = vperm.slane %v148, 0
    %v156 = vperm.slane %v148, 1
    %v157 = vperm.slane %v148, 2
    %v161 = vmul.f32 %v152, %v155
    %v162 = vmul.f32 %v152, %v156
    %v163 = vmul.f32 %v152, %v157
    %v250 = vunpack.c.l.b16 %v61
    %v251 = vunpack.c.h.b16 %v61
    %v252 = vunpack.c.l.b16 %v62
    %v253 = vunpack.c.l.b16 %v63
    %v254 = vunpack.c.h.b16 %v63
    %v255 = vunpack.c.l.b16 %v64
    %v256 = vunpack.c.l.b16 %v65
    %v257 = vunpack.c.h.b16 %v65
    %v258 = vunpack.c.l.b16 %v66
    %v259 = vunpack.c.l.b16 %v67
    %v260 = vunpack.c.h.b16 %v67
    %v261 = vunpack.c.l.b16 %v68
    %v262 = vunpack.c.l.b16 %v69
    %v263 = vunpack.c.h.b16 %v69
    %v264 = vunpack.c.l.b16 %v70
    %v265 = vunpack.c.l.b16 %v71
    %v266 = vunpack.c.h.b16 %v71
    %v267 = vunpack.c.l.b16 %v72
    %v268 = vunpack.c.l.b16 %v73
    %v269 = vunpack.c.h.b16 %v73
    %v270 = vunpack.c.l.b16 %v74
    %v271 = vunpack.c.l.b16 %v75
    %v272 = vunpack.c.h.b16 %v75
    %v273 = vunpack.c.l.b16 %v76
    %v274 = vunpack.c.l.b16 %v77
    %v275 = vunpack.c.h.b16 %v77
    %v276 = vunpack.c.l.b16 %v78
    %v277 = vunpack.c.l.b16 %v79
    %v278 = vunpack.c.h.b16 %v79
    %v279 = vunpack.c.l.b16 %v80
    %v280 = vunpack.c.l.b16 %v81
    %v281 = vunpack.c.h.b16 %v81
    %v282 = vunpack.c.l.b16 %v82
    %v283 = vunpack.c.l.b16 %v83
    %v284 = vunpack.c.h.b16 %v83
    %v285 = vunpack.c.l.b16 %v84
    %v286 = vunpack.c.l.b16 %v85
    %v287 = vunpack.c.h.b16 %v85
    %v288 = vunpack.c.l.b16 %v86
    %v289 = vunpack.c.l.b16 %v87
    %v290 = vunpack.c.h.b16 %v87
    %v291 = vunpack.c.l.b16 %v88
    %v292 = vunpack.c.l.b16 %v89
    %v293 = vunpack.c.h.b16 %v89
    %v294 = vunpack.c.l.b16 %v90
    %v295 = vunpack.c.l.b16 %v91
    %v296 = vunpack.c.h.b16 %v91
    %v297 = vunpack.c.l.b16 %v92
    %v298 = vunpack.c.l.b16 %v93
    %v299 = vunpack.c.h.b16 %v93
    %v300 = vunpack.c.l.b16 %v94
    %v301 = vunpack.c.l.b16 %v95
    %v302 = vunpack.c.h.b16 %v95
    %v303 = vunpack.c.l.b16 %v96
    %v304 = vunpack.c.l.b16 %v97
    %v305 = vunpack.c.h.b16 %v97
    %v306 = vunpack.c.l.b16 %v98
    %v307 = vunpack.c.l.b16 %v99
    %v308 = vunpack.c.h.b16 %v99
    %v309 = vunpack.c.l.b16 %v100
    %v310 = vunpack.c.l.b16 %v101
    %v311 = vunpack.c.h.b16 %v101
    %v312 = vunpack.c.l.b16 %v102
    %v313 = vunpack.c.l.b16 %v103
    %v314 = vunpack.c.h.b16 %v103
    %v315 = vunpack.c.l.b16 %v104
    %v316 = vunpack.c.l.b16 %v105
    %v317 = vunpack.c.h.b16 %v105
    %v318 = vunpack.c.l.b16 %v106
    %v319 = vunpack.c.l.b16 %v107
    %v320 = vunpack.c.h.b16 %v107
    %v321 = vunpack.c.l.b16 %v108
    %v322 = vunpack.c.l.b16 %v109
    %v323 = vunpack.c.h.b16 %v109
    %v324 = vunpack.c.l.b16 %v110
    %v325 = vunpack.c.l.b16 %v111
    %v326 = vunpack.c.h.b16 %v111
    %v327 = vunpack.c.l.b16 %v112
    %v328 = vunpack.c.l.b16 %v113
    %v329 = vunpack.c.h.b16 %v113
    %v330 = vunpack.c.l.b16 %v114
    %v331 = vunpack.c.l.b16 %v115
    %v332 = vunpack.c.h.b16 %v115
    %v333 = vunpack.c.l.b16 %v116
    %v334 = vunpack.c.l.b16 %v117
    %v335 = vunpack.c.h.b16 %v117
    %v336 = vunpack.c.l.b16 %v118
    %v337 = vunpack.c.l.b16 %v119
    %v338 = vunpack.c.h.b16 %v119
    %v339 = vunpack.c.l.b16 %v120
    %v340 = vunpack.c.l.b16 %v121
    %v341 = vunpack.c.h.b16 %v121
    %v342 = vunpack.c.l.b16 %v122
    %v343 = vunpack.c.l.b16 %v123
    %v344 = vunpack.c.h.b16 %v123
    %v345 = vunpack.c.l.b16 %v124
    %v346 = vunpack.c.l.b16 %v125
    %v347 = vunpack.c.h.b16 %v125
    %v348 = vunpack.c.l.b16 %v126
    %v349 = vunpack.c.l.b16 %v127
    %v350 = vunpack.c.h.b16 %v127
    %v351 = vunpack.c.l.b16 %v128
    %v352 = vunpack.c.l.b16 %v129
    %v353 = vunpack.c.h.b16 %v129
    %v354 = vunpack.c.l.b16 %v130
    %v355 = vunpack.c.l.b16 %v131
    %v356 = vunpack.c.h.b16 %v131
    %v357 = vunpack.c.l.b16 %v132
    %v358 = vunpack.c.l.b16 %v133
    %v359 = vunpack.c.h.b16 %v133
    %v360 = vunpack.c.l.b16 %v134
    %v361 = vunpack.c.l.b16 %v135
    %v362 = vunpack.c.h.b16 %v135
    %v363 = vunpack.c.l.b16 %v136
    %v364 = vunpack.c.l.b16 %v137
    %v365 = vunpack.c.h.b16 %v137
    %v366 = vunpack.c.l.b16 %v138
    %v367 = vunpack.c.l.b16 %v139
    %v368 = vunpack.c.h.b16 %v139
    %v369 = vunpack.c.l.b16 %v140
    %v370 = vunpack.c.l.b16 %v141
    %v371 = vunpack.c.h.b16 %v141
    %v372 = vunpack.c.l.b16 %v142
    %v373 = vunpack.c.l.b16 %v143
    %v374 = vunpack.c.h.b16 %v143
    %v375 = vunpack.c.l.b16 %v144
    %v376 = vunpack.c.l.b16 %v145
    %v377 = vunpack.c.h.b16 %v145
    %v378 = vunpack.c.l.b16 %v146
    %v379 = vpack.c.b16 %v253, %v250
    %v380 = vpack.c.b16 %v254, %v251
    %v381 = vpack.c.b16 %v255, %v252
    %v382 = vpack.c.b16 %v259, %v256
    %v383 = vpack.c.b16 %v260, %v257
    %v384 = vpack.c.b16 %v261, %v258
    %v385 = vpack.c.b16 %v265, %v262
    %v386 = vpack.c.b16 %v266, %v263
    %v387 = vpack.c.b16 %v267, %v264
    %v388 = vpack.c.b16 %v271, %v268
    %v389 = vpack.c.b16 %v272, %v269
    %v390 = vpack.c.b16 %v273, %v270
    %v391 = vpack.c.b16 %v277, %v274
    %v392 = vpack.c.b16 %v278, %v275
    %v393 = vpack.c.b16 %v279, %v276
    %v394 = vpack.c.b16 %v283, %v280
    %v395 = vpack.c.b16 %v284, %v281
    %v396 = vpack.c.b16 %v285, %v282
    %v397 = vpack.c.b16 %v289, %v286
    %v398 = vpack.c.b16 %v290, %v287
    %v399 = vpack.c.b16 %v291, %v288
    %v400 = vpack.c.b16 %v295, %v292
    %v401 = vpack.c.b16 %v296, %v293
    %v402 = vpack.c.b16 %v297, %v294
    %v403 = vpack.c.b16 %v301, %v298
    %v404 = vpack.c.b16 %v302, %v299
    %v405 = vpack.c.b16 %v303, %v300
    %v406 = vpack.c.b16 %v307, %v304
    %v407 = vpack.c.b16 %v308, %v305
    %v408 = vpack.c.b16 %v309, %v306
    %v409 = vpack.c.b16 %v313, %v310
    %v410 = vpack.c.b16 %v314, %v311
    %v411 = vpack.c.b16 %v315, %v312
    %v412 = vpack.c.b16 %v319, %v316
    %v413 = vpack.c.b16 %v320, %v317
    %v414 = vpack.c.b16 %v321, %v318
    %v415 = vpack.c.b16 %v325, %v322
    %v416 = vpack.c.b16 %v326, %v323
    %v417 = vpack.c.b16 %v327, %v324
    %v418 = vpack.c.b16 %v331, %v328
    %v419 = vpack.c.b16 %v332, %v329
    %v420 = vpack.c.b16 %v333, %v330
    %v421 = vpack.c.b16 %v337, %v334
    %v422 = vpack.c.b16 %v338, %v335
    %v423 = vpack.c.b16 %v339, %v336
    %v424 = vpack.c.b16 %v343, %v340
    %v425 = vpack.c.b16 %v344, %v341
    %v426 = vpack.c.b16 %v345, %v342
    %v427 = vpack.c.b16 %v349, %v346
    %v428 = vpack.c.b16 %v350, %v347
    %v429 = vpack.c.b16 %v351, %v348
    %v430 = vpack.c.b16 %v355, %v352
    %v431 = vpack.c.b16 %v356, %v353
    %v432 = vpack.c.b16 %v357, %v354
    %v433 = vpack.c.b16 %v361, %v358
    %v434 = vpack.c.b16 %v362, %v359
    %v435 = vpack.c.b16 %v363, %v360
    %v436 = vpack.c.b16 %v367, %v364
    %v437 = vpack.c.b16 %v368, %v365
    %v438 = vpack.c.b16 %v369, %v366
    %v439 = vpack.c.b16 %v373, %v370
    %v440 = vpack.c.b16 %v374, %v371
    %v441 = vpack.c.b16 %v375, %v372
    %v442 = vpack.c.b16 %v376, %v376
    %v443 = vpack.c.b16 %v377, %v377
    %v444 = vpack.c.b16 %v378, %v378
    %vm508 = vcmask 703488
    %v510 = vsel %vm508, %v60, 0
    %vm512 = vcmask 1042432
    %v514 = vsel %vm512, %v442, 0
    %v517 = vsel %vm512, %v443, 0
    %v520 = vsel %vm512, %v444, 0
    %522 = vmatpush.bf16.msra.mxu0 %v400
    %523 = vmatpush.bf16.msra.mxu0 %v397
    %524 = vmatpush.bf16.msra.mxu0 %v394
    %525 = vmatpush.bf16.msra.mxu0 %v391
    %526 = vmatpush.bf16.msra.mxu0 %v388
    %527 = vmatpush.bf16.msra.mxu0 %v385
    %528 = vmatpush.bf16.msra.mxu0 %v382
    %529 = vmatpush.bf16.msra.mxu0 %v379
    %530 = vmatmul.bf16.gmra.mxu0 %v58
    %v531 = vpop.f32.mrf.mxu0
    %v532 = vadd.f32 %v161, %v531
    %v533 = vpop.f32.mrf.mxu0
    %534 = vdwg.mxu0
    %535 = vmatpush.bf16.msra.mxu0 %v424
    %536 = vmatpush.bf16.msra.mxu0 %v421
    %537 = vmatpush.bf16.msra.mxu0 %v418
    %538 = vmatpush.bf16.msra.mxu0 %v415
    %539 = vmatpush.bf16.msra.mxu0 %v412
    %540 = vmatpush.bf16.msra.mxu0 %v409
    %541 = vmatpush.bf16.msra.mxu0 %v406
    %542 = vmatpush.bf16.msra.mxu0 %v403
    %543 = vmatmul.bf16.gmra.mxu0 %v59
    %v544 = vpop.f32.mrf.mxu0
    %v545 = vadd.f32 %v532, %v544
    %v546 = vpop.f32.mrf.mxu0
    %547 = vdwg.mxu0
    %548 = vmatpush.bf16.msra.mxu0 0
    %549 = vmatpush.bf16.msra.mxu0 0
    %550 = vmatpush.bf16.msra.mxu0 %v514
    %551 = vmatpush.bf16.msra.mxu0 %v439
    %552 = vmatpush.bf16.msra.mxu0 %v436
    %553 = vmatpush.bf16.msra.mxu0 %v433
    %554 = vmatpush.bf16.msra.mxu0 %v430
    %555 = vmatpush.bf16.msra.mxu0 %v427
    %556 = vmatmul.bf16.gmra.mxu0 %v510
    %v557 = vpop.f32.mrf.mxu0
    %v558 = vadd.f32 %v545, %v557
    %v559 = vpop.f32.mrf.mxu0
    %560 = vdwg.mxu0
    %561 = vmatpush.bf16.msra.mxu0 %v401
    %562 = vmatpush.bf16.msra.mxu0 %v398
    %563 = vmatpush.bf16.msra.mxu0 %v395
    %564 = vmatpush.bf16.msra.mxu0 %v392
    %565 = vmatpush.bf16.msra.mxu0 %v389
    %566 = vmatpush.bf16.msra.mxu0 %v386
    %567 = vmatpush.bf16.msra.mxu0 %v383
    %568 = vmatpush.bf16.msra.mxu0 %v380
    %569 = vmatmul.bf16.gmra.mxu0 %v58
    %v570 = vpop.f32.mrf.mxu0
    %v571 = vadd.f32 %v162, %v570
    %v572 = vpop.f32.mrf.mxu0
    %573 = vdwg.mxu0
    %574 = vmatpush.bf16.msra.mxu0 %v425
    %575 = vmatpush.bf16.msra.mxu0 %v422
    %576 = vmatpush.bf16.msra.mxu0 %v419
    %577 = vmatpush.bf16.msra.mxu0 %v416
    %578 = vmatpush.bf16.msra.mxu0 %v413
    %579 = vmatpush.bf16.msra.mxu0 %v410
    %580 = vmatpush.bf16.msra.mxu0 %v407
    %581 = vmatpush.bf16.msra.mxu0 %v404
    %582 = vmatmul.bf16.gmra.mxu0 %v59
    %v583 = vpop.f32.mrf.mxu0
    %v584 = vadd.f32 %v571, %v583
    %v585 = vpop.f32.mrf.mxu0
    %586 = vdwg.mxu0
    %587 = vmatpush.bf16.msra.mxu0 0
    %588 = vmatpush.bf16.msra.mxu0 0
    %589 = vmatpush.bf16.msra.mxu0 %v517
    %590 = vmatpush.bf16.msra.mxu0 %v440
    %591 = vmatpush.bf16.msra.mxu0 %v437
    %592 = vmatpush.bf16.msra.mxu0 %v434
    %593 = vmatpush.bf16.msra.mxu0 %v431
    %594 = vmatpush.bf16.msra.mxu0 %v428
    %595 = vmatmul.bf16.gmra.mxu0 %v510
    %v596 = vpop.f32.mrf.mxu0
    %v597 = vadd.f32 %v584, %v596
    %v598 = vpop.f32.mrf.mxu0
    %599 = vdwg.mxu0
    %600 = vmatpush.bf16.msra.mxu0 %v402
    %601 = vmatpush.bf16.msra.mxu0 %v399
    %602 = vmatpush.bf16.msra.mxu0 %v396
    %603 = vmatpush.bf16.msra.mxu0 %v393
    %604 = vmatpush.bf16.msra.mxu0 %v390
    %605 = vmatpush.bf16.msra.mxu0 %v387
    %606 = vmatpush.bf16.msra.mxu0 %v384
    %607 = vmatpush.bf16.msra.mxu0 %v381
    %608 = vmatmul.bf16.gmra.mxu0 %v58
    %v609 = vpop.f32.mrf.mxu0
    %v610 = vadd.f32 %v163, %v609
    %v611 = vpop.f32.mrf.mxu0
    %612 = vdwg.mxu0
    %613 = vmatpush.bf16.msra.mxu0 %v426
    %614 = vmatpush.bf16.msra.mxu0 %v423
    %615 = vmatpush.bf16.msra.mxu0 %v420
    %616 = vmatpush.bf16.msra.mxu0 %v417
    %617 = vmatpush.bf16.msra.mxu0 %v414
    %618 = vmatpush.bf16.msra.mxu0 %v411
    %619 = vmatpush.bf16.msra.mxu0 %v408
    %620 = vmatpush.bf16.msra.mxu0 %v405
    %621 = vmatmul.bf16.gmra.mxu0 %v59
    %v622 = vpop.f32.mrf.mxu0
    %v623 = vadd.f32 %v610, %v622
    %v624 = vpop.f32.mrf.mxu0
    %625 = vdwg.mxu0
    %626 = vmatpush.bf16.msra.mxu0 0
    %627 = vmatpush.bf16.msra.mxu0 0
    %628 = vmatpush.bf16.msra.mxu0 %v520
    %629 = vmatpush.bf16.msra.mxu0 %v441
    %630 = vmatpush.bf16.msra.mxu0 %v438
    %631 = vmatpush.bf16.msra.mxu0 %v435
    %632 = vmatpush.bf16.msra.mxu0 %v432
    %633 = vmatpush.bf16.msra.mxu0 %v429
    %634 = vmatmul.bf16.gmra.mxu0 %v510
    %v635 = vpop.f32.mrf.mxu0
    %v636 = vadd.f32 %v623, %v635
    %v637 = vpop.f32.mrf.mxu0
    %638 = vdwg.mxu0
    %s639 = scalar_lea.vmem %s3, 1
    %v640 = vld [vmem:[%s639] ss:$2 sm:$0x7]
    %v642 = vperm.slane %v640, 0
    %v643 = vperm.slane %v640, 1
    %v644 = vperm.slane %v640, 2
    %v648 = vadd.f32 %v558, %v642
    %v649 = vadd.f32 %v597, %v643
    %v650 = vadd.f32 %v636, %v644
    %v654 = vrot.slane %v649, 6
    %v655 = vrot.slane %v650, 4
    %vm656 = vcmask 1041408
    %v657 = vsel %vm656, %v648, %v654
    %vm658 = vcmask 1043456
    %v659 = vsel %vm658, %v657, %v655
    %661 = vst [vmem:[#allocation7] sm:$0x3f] %v659
    // Predicated region
    $region26: #{linear_net_forward.1} parent=1 // pred_check
      _
    $region27: #{linear_net_forward.1} parent=1 // pred_check_branch
      %663 = sbr.rel (0) target = $region29
    $region28: #{linear_net_forward.1} parent=1 // pred_region
      %665 = vsyncadd [#allocation4], 0
      %s667 = sshll.u32 [#allocation7], 4
      %s668 = int_to_ptr.vmem [resolvable:$true] %s667
      %s669 = sshll.u32 %s4, 4
      %s670 = int_to_ptr.hbm [resolvable:$true] %s669
      %672 = dma.vmem_to_hbm [thread:$0]  %s668, 96, %s670, [#allocation4]
    $region29: #{linear_net_forward.1} parent=1 // pred_fallthru
      _
    // Predicated region
    $region30: #{linear_net_forward.1} parent=1 // pred_check
      _
    $region31: #{linear_net_forward.1} parent=1 // pred_check_branch
      %674 = sbr.rel (0) target = $region33
    $region32: #{linear_net_forward.1} parent=1 // pred_region
      %676 = dma.done [#allocation4], 96
    $region33: #{linear_net_forward.1} parent=1 // pred_fallthru
      _
    %677 = vsyncpa [#allocation3], 1
    %678 = vsyncpa [#allocation6], 1
    %679 = vsyncpa [#allocation4], 1

</llo_original>
